<compile_context>
chip_gen: v6e
topology: v6e:2x2x1
jax: 0.10.0
libtpu: 0.0.40
codegen_flags: <defaults>
</compile_context>

<pallas_src>
import jax
import jax.numpy as jnp
from jax.experimental import pallas as pl
from jax.experimental.pallas import tpu as pltpu

_LANE = 128      # TPU lane width: pad output feature dim to a multiple of this
_BM_CAP = 1024   # max batch rows per grid tile (keeps VMEM use small on all gens)


def generator_kernel(x_ref, w1_ref, b1_ref, w2_ref, b2_ref, w3_ref, b3_ref,
                     o_ref):
    # Whole hot path (3 matmuls + ReLU/Tanh) fused per batch tile; all weights
    # are VMEM-resident, so each grid step only streams the x / out tiles.
    x = x_ref[...]                                                # (bm, latent)

    h1 = jnp.dot(x, w1_ref[...], preferred_element_type=jnp.float32)
    h1 = jnp.maximum(h1 + b1_ref[...], 0.0)                       # (bm, h1)

    h2 = jnp.dot(h1, w2_ref[...], preferred_element_type=jnp.float32)
    h2 = jnp.maximum(h2 + b2_ref[...], 0.0)                       # (bm, h2)

    out = jnp.dot(h2, w3_ref[...], preferred_element_type=jnp.float32)
    o_ref[...] = jnp.tanh(out + b3_ref[...]).astype(o_ref.dtype)  # (bm, out_p)


def _round_up(n, m):
    return -(-n // m) * m


def _batch_tiling(B):
    """Pick (rows_per_tile, n_tiles): few fat tiles, >=2 tiles when B > 8."""
    if B <= 8:
        return _round_up(B, 8), 1
    n_tiles = max(2, -(-B // _BM_CAP))          # >=2 so both v7x TCs get work
    bm = _round_up(-(-B // n_tiles), 8)         # sublane-align rows per tile
    n_tiles = -(-B // bm)
    return bm, n_tiles


def generator_forward(x, params):
    """x: (B, latent) float32 -> (B, 784) float32."""
    w1, b1, w2, b2, w3, b3 = params
    B, latent = x.shape
    h1d = w1.shape[1]
    h2d = w2.shape[1]
    out_dim = w3.shape[1]

    # Batch tiling (pad rows with zeros if B doesn't divide evenly).
    bm, n_tiles = _batch_tiling(B)
    Bp = bm * n_tiles
    if Bp != B:
        x = jnp.pad(x, ((0, Bp - B), (0, 0)))

    # Lane-dense output: pad 784 -> 896 (7 x 128); slice back after the call.
    out_p = _round_up(out_dim, _LANE)
    if out_p != out_dim:
        w3 = jnp.pad(w3, ((0, 0), (0, out_p - out_dim)))
        b3 = jnp.pad(b3, ((0, 0), (0, out_p - out_dim)))

    # Grid-invariant full-extent blocks for weights/biases (stay in VMEM).
    full = lambda shape: pl.BlockSpec(shape, lambda i: (0, 0))

    out = pl.pallas_call(
        generator_kernel,
        out_shape=jax.ShapeDtypeStruct((Bp, out_p), x.dtype),
        grid=(n_tiles,),
        in_specs=[
            pl.BlockSpec((bm, latent), lambda i: (i, 0)),    # x tile
            full((latent, h1d)), full((1, h1d)),             # layer 1
            full((h1d, h2d)),    full((1, h2d)),             # layer 2
            full((h2d, out_p)),  full((1, out_p)),           # layer 3 (padded)
        ],
        out_specs=pl.BlockSpec((bm, out_p), lambda i: (i, 0)),
        compiler_params=pltpu.CompilerParams(
            dimension_semantics=("parallel",)),
    )(x, w1, b1, w2, b2, w3, b3)

    return out[:B, :out_dim]


def init_params(key, latent_size, hidden_1, hidden_2, out_dim=784):
    """Deterministic synthetic init (PyTorch Linear shapes, pre-transposed)."""
    ks = jax.random.split(key, 6)

    def lin(kw, kb, fan_in, fan_out):
        bound = 1.0 / jnp.sqrt(fan_in)
        w = jax.random.uniform(kw, (fan_in, fan_out), jnp.float32, -bound, bound)
        b = jax.random.uniform(kb, (1, fan_out), jnp.float32, -bound, bound)
        return w, b

    w1, b1 = lin(ks[0], ks[1], latent_size, hidden_1)
    w2, b2 = lin(ks[2], ks[3], hidden_1, hidden_2)
    w3, b3 = lin(ks[4], ks[5], hidden_2, out_dim)
    return (w1, b1, w2, b2, w3, b3)


def generator_ref(x, params):
    w1, b1, w2, b2, w3, b3 = params
    h = jnp.maximum(x @ w1 + b1, 0.0)
    h = jnp.maximum(h @ w2 + b2, 0.0)
    return jnp.tanh(h @ w3 + b3)


if __name__ == "__main__":
    config = {"latent_size": 32, "hidden_1": 128, "hidden_2": 64}
    batch = 16

    key = jax.random.PRNGKey(0)
    kx, kp = jax.random.split(key)
    x = jax.random.normal(kx, (batch, config["latent_size"]), jnp.float32)
    params = init_params(kp, config["latent_size"], config["hidden_1"],
                         config["hidden_2"])

    out = jax.jit(generator_forward)(x, params)
    out = jax.block_until_ready(out)

    ref = generator_ref(x, params)
    assert out.shape == (batch, 784), out.shape
    assert jnp.allclose(out, ref, atol=1e-5, rtol=1e-5), \
        float(jnp.max(jnp.abs(out - ref)))

    print("KERNEL_OK")
</pallas_src>

<mosaic_0001>
module attributes {stable_mosaic.version = 11 : i64} {
  func.func @generator_kernel(%arg0: i32, %arg1: memref<8x32xf32, #tpu.memory_space<vmem>>, %arg2: memref<32x128xf32, #tpu.memory_space<vmem>>, %arg3: memref<1x128xf32, #tpu.memory_space<vmem>>, %arg4: memref<128x64xf32, #tpu.memory_space<vmem>>, %arg5: memref<1x64xf32, #tpu.memory_space<vmem>>, %arg6: memref<64x896xf32, #tpu.memory_space<vmem>>, %arg7: memref<1x896xf32, #tpu.memory_space<vmem>>, %arg8: memref<8x896xf32, #tpu.memory_space<vmem>>) attributes {dimension_semantics = [#tpu.dimension_semantics<parallel>], iteration_bounds = array<i64: 2>, scalar_prefetch = 0 : i64, scratch_operands = 0 : i64, tpu.core_type = #tpu.core_type<tc>, window_params = [{transform_indices = @transform_0, window_bounds = array<i64: 8, 32>}, {pipeline_mode = #tpu.pipeline_mode<synchronous>, transform_indices = @transform_1, window_bounds = array<i64: 32, 128>}, {pipeline_mode = #tpu.pipeline_mode<synchronous>, transform_indices = @transform_2, window_bounds = array<i64: 1, 128>}, {pipeline_mode = #tpu.pipeline_mode<synchronous>, transform_indices = @transform_3, window_bounds = array<i64: 128, 64>}, {pipeline_mode = #tpu.pipeline_mode<synchronous>, transform_indices = @transform_4, window_bounds = array<i64: 1, 64>}, {pipeline_mode = #tpu.pipeline_mode<synchronous>, transform_indices = @transform_5, window_bounds = array<i64: 64, 896>}, {pipeline_mode = #tpu.pipeline_mode<synchronous>, transform_indices = @transform_6, window_bounds = array<i64: 1, 896>}, {transform_indices = @transform_7, window_bounds = array<i64: 8, 896>}]} {
    %c0 = arith.constant 0 : index
    %c0_0 = arith.constant 0 : index
    %0 = vector.load %arg1[%c0, %c0_0] : memref<8x32xf32, #tpu.memory_space<vmem>>, vector<8x32xf32>
    %c0_1 = arith.constant 0 : index
    %c0_2 = arith.constant 0 : index
    %1 = vector.load %arg2[%c0_1, %c0_2] : memref<32x128xf32, #tpu.memory_space<vmem>>, vector<32x128xf32>
    %cst = arith.constant dense<0.000000e+00> : vector<8x128xf32>
    %2 = tpu.matmul %0, %1, %cst {dimension_numbers = #tpu.dot_dimension_numbers<[1], [0], [0], [1], [0, 0, 1, 1], [], []>} : vector<8x32xf32>, vector<32x128xf32>, vector<8x128xf32> -> vector<8x128xf32>
    %c0_3 = arith.constant 0 : index
    %c0_4 = arith.constant 0 : index
    %3 = vector.load %arg3[%c0_3, %c0_4] : memref<1x128xf32, #tpu.memory_space<vmem>>, vector<1x128xf32>
    %4 = vector.broadcast %3 : vector<1x128xf32> to vector<8x128xf32>
    %5 = arith.addf %2, %4 : vector<8x128xf32>
    %cst_5 = arith.constant 0.000000e+00 : f32
    %6 = vector.broadcast %cst_5 : f32 to vector<8x128xf32>
    %7 = arith.maximumf %5, %6 : vector<8x128xf32>
    %c0_6 = arith.constant 0 : index
    %c0_7 = arith.constant 0 : index
    %8 = vector.load %arg4[%c0_6, %c0_7] : memref<128x64xf32, #tpu.memory_space<vmem>>, vector<128x64xf32>
    %cst_8 = arith.constant dense<0.000000e+00> : vector<8x64xf32>
    %9 = tpu.matmul %7, %8, %cst_8 {dimension_numbers = #tpu.dot_dimension_numbers<[1], [0], [0], [1], [0, 0, 1, 1], [], []>} : vector<8x128xf32>, vector<128x64xf32>, vector<8x64xf32> -> vector<8x64xf32>
    %c0_9 = arith.constant 0 : index
    %c0_10 = arith.constant 0 : index
    %10 = vector.load %arg5[%c0_9, %c0_10] : memref<1x64xf32, #tpu.memory_space<vmem>>, vector<1x64xf32>
    %11 = vector.broadcast %10 : vector<1x64xf32> to vector<8x64xf32>
    %12 = arith.addf %9, %11 : vector<8x64xf32>
    %cst_11 = arith.constant 0.000000e+00 : f32
    %13 = vector.broadcast %cst_11 : f32 to vector<8x64xf32>
    %14 = arith.maximumf %12, %13 : vector<8x64xf32>
    %c0_12 = arith.constant 0 : index
    %c0_13 = arith.constant 0 : index
    %15 = vector.load %arg6[%c0_12, %c0_13] : memref<64x896xf32, #tpu.memory_space<vmem>>, vector<64x896xf32>
    %cst_14 = arith.constant dense<0.000000e+00> : vector<8x896xf32>
    %16 = tpu.matmul %14, %15, %cst_14 {dimension_numbers = #tpu.dot_dimension_numbers<[1], [0], [0], [1], [0, 0, 1, 1], [], []>} : vector<8x64xf32>, vector<64x896xf32>, vector<8x896xf32> -> vector<8x896xf32>
    %c0_15 = arith.constant 0 : index
    %c0_16 = arith.constant 0 : index
    %17 = vector.load %arg7[%c0_15, %c0_16] : memref<1x896xf32, #tpu.memory_space<vmem>>, vector<1x896xf32>
    %18 = vector.broadcast %17 : vector<1x896xf32> to vector<8x896xf32>
    %19 = arith.addf %16, %18 : vector<8x896xf32>
    %20 = math.tanh %19 : vector<8x896xf32>
    %c0_17 = arith.constant 0 : index
    %c0_18 = arith.constant 0 : index
    %21 = vector.load %arg8[%c0_17, %c0_18] : memref<8x896xf32, #tpu.memory_space<vmem>>, vector<8x896xf32>
    tpu.vector_store %arg8[%c0_17, %c0_18], %20 {strides = array<i32>} : memref<8x896xf32, #tpu.memory_space<vmem>>, vector<8x896xf32>,
    return
  }
  func.func @transform_0(%arg0: i32) -> (i32, i32) {
    %c0_i32 = arith.constant 0 : i32
    %c0_i32_0 = arith.constant 0 : i32
    return %arg0, %c0_i32 : i32, i32
  }
  func.func @transform_1(%arg0: i32) -> (i32, i32) {
    %c0_i32 = arith.constant 0 : i32
    %c0_i32_0 = arith.constant 0 : i32
    %c0_i32_1 = arith.constant 0 : i32
    return %c0_i32, %c0_i32_0 : i32, i32
  }
  func.func @transform_2(%arg0: i32) -> (i32, i32) {
    %c0_i32 = arith.constant 0 : i32
    %c0_i32_0 = arith.constant 0 : i32
    %c0_i32_1 = arith.constant 0 : i32
    return %c0_i32, %c0_i32_0 : i32, i32
  }
  func.func @transform_3(%arg0: i32) -> (i32, i32) {
    %c0_i32 = arith.constant 0 : i32
    %c0_i32_0 = arith.constant 0 : i32
    %c0_i32_1 = arith.constant 0 : i32
    return %c0_i32, %c0_i32_0 : i32, i32
  }
  func.func @transform_4(%arg0: i32) -> (i32, i32) {
    %c0_i32 = arith.constant 0 : i32
    %c0_i32_0 = arith.constant 0 : i32
    %c0_i32_1 = arith.constant 0 : i32
    return %c0_i32, %c0_i32_0 : i32, i32
  }
  func.func @transform_5(%arg0: i32) -> (i32, i32) {
    %c0_i32 = arith.constant 0 : i32
    %c0_i32_0 = arith.constant 0 : i32
    %c0_i32_1 = arith.constant 0 : i32
    return %c0_i32, %c0_i32_0 : i32, i32
  }
  func.func @transform_6(%arg0: i32) -> (i32, i32) {
    %c0_i32 = arith.constant 0 : i32
    %c0_i32_0 = arith.constant 0 : i32
    %c0_i32_1 = arith.constant 0 : i32
    return %c0_i32, %c0_i32_0 : i32, i32
  }
  func.func @transform_7(%arg0: i32) -> (i32, i32) {
    %c0_i32 = arith.constant 0 : i32
    %c0_i32_0 = arith.constant 0 : i32
    return %arg0, %c0_i32 : i32, i32
  }
}

</mosaic_0001>

<llo_original>
// kernel: generator_forward.1
$region0: #{generator_forward.1}
  #allocation0 [shape = 'u32[]', space=smem, size = 0x4, offset = 0x4, fixed_abs, tag = 'smem constant byte address 0x4 - core index']
  #allocation1 [shape = 'u32[144,128]{1,0:T(1,128)}', space=vmem, size = 0x12000, scoped, tag = 'internal scratch']
  %s0 = inlined_call_operand.vmem [shape: f32[16,32], index: 0, kind: input, shape index: {}]
  %s1 = inlined_call_operand.vmem [shape: f32[32,128], index: 1, kind: input, shape index: {}]
  %s2 = inlined_call_operand.vmem [shape: f32[1,128], index: 2, kind: input, shape index: {}]
  %s3 = inlined_call_operand.vmem [shape: f32[128,64], index: 3, kind: input, shape index: {}]
  %s4 = inlined_call_operand.vmem [shape: f32[1,64], index: 4, kind: input, shape index: {}]
  %s5 = inlined_call_operand.vmem [shape: f32[64,896], index: 5, kind: input, shape index: {}]
  %s6 = inlined_call_operand.vmem [shape: f32[1,896], index: 6, kind: input, shape index: {}]
  %s7 = inlined_call_operand.hbm [shape: f32[16,896], index: 7, kind: output, shape index: {}]
  %s8 = sld [smem:[#allocation0]]
  $region61: #{generator_forward.1} parent=0
    _
  %s10 = ssub.s32 1, %s8
  %s11 = scalar_select 0, %s10, %s8
  $region1: #{generator_forward.1} parent=0
    #allocation2 [shape = 'u8[57344]{0}', space=vmem, size = 0xe000, scoped, tag = 'output window, operand 0']
    #allocation3 [shape = 's32[2]{0}', space=sflag, size = 0x8, scoped, tag = 'scoped memory for generator_forward.1']
    %12 = vsyncpa [#allocation3], 0
    %s13 = scalar_lea.sflag [#allocation3], 1
    %14 = vsyncpa %s13, 0
    loop: start=0, step=1, limit=4
    $region2: #{generator_forward.1} parent=1 // loop_pre_header
      _
    $region3: #{generator_forward.1} parent=1 // loop_header
      %s16 = sphi 0, %s20
      %p17 = scmp.ge.s32.totalorder %s16, 4
      %s26 = sphi 0, %s28
      %s29 = sphi 0, %s26
      %s30 = sphi 0, %s29
      %s46 = sphi 0, %s30
      %s50 = sphi 0, %s50
      %s52 = sphi 0, %s50
      %s53 = sphi 0, %s52
      %s67 = sphi 0, %s53
      %s71 = sphi 0, %s71
      %s73 = sphi 0, %s71
      %s74 = sphi 0, %s73
      %s88 = sphi 0, %s74
      %s92 = sphi 0, %s92
      %s94 = sphi 0, %s92
      %s95 = sphi 0, %s94
      %s109 = sphi 0, %s95
      %s113 = sphi 0, %s113
      %s115 = sphi 0, %s113
      %s116 = sphi 0, %s115
      %s130 = sphi 0, %s116
      %s134 = sphi 0, %s134
      %s136 = sphi 0, %s134
      %s137 = sphi 0, %s136
      %s151 = sphi 0, %s137
      %s155 = sphi 0, %s155
      %s157 = sphi 0, %s155
      %s158 = sphi 0, %s157
      %s172 = sphi 0, %s158
      %s178 = sphi 0, %s180
      %s181 = sphi 0, %s178
      %s182 = sphi 0, %s181
      %s198 = sphi 0, %s182
    $region4: #{generator_forward.1} parent=1 // loop_header_branch
      %19 = sbr.rel (%p17) target = $region8
    $region5: #{generator_forward.1} parent=1 // loop_body
      %s21 = ssub.s32 %s16, 1
      %s22 = ssub.s32 %s16, 2
      %s23 = sadd.s32 %s16, 1
      %s24 = ssub.s32 %s16, %s23
      %p25 = scmp.eq.s32.totalorder %s24, 0
      %s27 = sadd.s32 %s26, 1
      %s28 = scalar_select %p25, %s26, %s27
      %p31 = pneg %p25
      %p32 = scmp.eq.s32.totalorder %s16, 1
      %p33 = por %p31, %p32
      %p34 = scmp.ne.s32.totalorder %s26, %s29
      %p35 = scmp.eq.s32.totalorder %s16, 0
      %p36 = por %p34, %p35
      %p37 = scmp.ne.s32.totalorder %s26, %s29
      %p38 = scmp.eq.s32.totalorder %s21, 1
      %p39 = por %p37, %p38
      %p40 = scmp.ne.s32.totalorder %s29, %s30
      %p41 = scmp.eq.s32.totalorder %s21, 0
      %p42 = por %p40, %p41
      %p43 = scmp.ne.s32.totalorder %s29, %s30
      %p44 = scmp.eq.s32.totalorder %s22, 1
      %p45 = por %p43, %p44
      %p47 = scmp.ne.s32.totalorder %s30, %s46
      %p48 = scmp.eq.s32.totalorder %s22, 0
      %p49 = por %p47, %p48
      %s51 = sadd.s32 %s50, 1
      %p54 = scmp.eq.s32.totalorder %s16, 1
      %p55 = scmp.ne.s32.totalorder %s50, %s52
      %p56 = scmp.eq.s32.totalorder %s16, 0
      %p57 = por %p55, %p56
      %p58 = scmp.ne.s32.totalorder %s50, %s52
      %p59 = scmp.eq.s32.totalorder %s21, 1
      %p60 = por %p58, %p59
      %p61 = scmp.ne.s32.totalorder %s52, %s53
      %p62 = scmp.eq.s32.totalorder %s21, 0
      %p63 = por %p61, %p62
      %p64 = scmp.ne.s32.totalorder %s52, %s53
      %p65 = scmp.eq.s32.totalorder %s22, 1
      %p66 = por %p64, %p65
      %p68 = scmp.ne.s32.totalorder %s53, %s67
      %p69 = scmp.eq.s32.totalorder %s22, 0
      %p70 = por %p68, %p69
      %s72 = sadd.s32 %s71, 1
      %p75 = scmp.eq.s32.totalorder %s16, 1
      %p76 = scmp.ne.s32.totalorder %s71, %s73
      %p77 = scmp.eq.s32.totalorder %s16, 0
      %p78 = por %p76, %p77
      %p79 = scmp.ne.s32.totalorder %s71, %s73
      %p80 = scmp.eq.s32.totalorder %s21, 1
      %p81 = por %p79, %p80
      %p82 = scmp.ne.s32.totalorder %s73, %s74
      %p83 = scmp.eq.s32.totalorder %s21, 0
      %p84 = por %p82, %p83
      %p85 = scmp.ne.s32.totalorder %s73, %s74
      %p86 = scmp.eq.s32.totalorder %s22, 1
      %p87 = por %p85, %p86
      %p89 = scmp.ne.s32.totalorder %s74, %s88
      %p90 = scmp.eq.s32.totalorder %s22, 0
      %p91 = por %p89, %p90
      %s93 = sadd.s32 %s92, 1
      %p96 = scmp.eq.s32.totalorder %s16, 1
      %p97 = scmp.ne.s32.totalorder %s92, %s94
      %p98 = scmp.eq.s32.totalorder %s16, 0
      %p99 = por %p97, %p98
      %p100 = scmp.ne.s32.totalorder %s92, %s94
      %p101 = scmp.eq.s32.totalorder %s21, 1
      %p102 = por %p100, %p101
      %p103 = scmp.ne.s32.totalorder %s94, %s95
      %p104 = scmp.eq.s32.totalorder %s21, 0
      %p105 = por %p103, %p104
      %p106 = scmp.ne.s32.totalorder %s94, %s95
      %p107 = scmp.eq.s32.totalorder %s22, 1
      %p108 = por %p106, %p107
      %p110 = scmp.ne.s32.totalorder %s95, %s109
      %p111 = scmp.eq.s32.totalorder %s22, 0
      %p112 = por %p110, %p111
      %s114 = sadd.s32 %s113, 1
      %p117 = scmp.eq.s32.totalorder %s16, 1
      %p118 = scmp.ne.s32.totalorder %s113, %s115
      %p119 = scmp.eq.s32.totalorder %s16, 0
      %p120 = por %p118, %p119
      %p121 = scmp.ne.s32.totalorder %s113, %s115
      %p122 = scmp.eq.s32.totalorder %s21, 1
      %p123 = por %p121, %p122
      %p124 = scmp.ne.s32.totalorder %s115, %s116
      %p125 = scmp.eq.s32.totalorder %s21, 0
      %p126 = por %p124, %p125
      %p127 = scmp.ne.s32.totalorder %s115, %s116
      %p128 = scmp.eq.s32.totalorder %s22, 1
      %p129 = por %p127, %p128
      %p131 = scmp.ne.s32.totalorder %s116, %s130
      %p132 = scmp.eq.s32.totalorder %s22, 0
      %p133 = por %p131, %p132
      %s135 = sadd.s32 %s134, 1
      %p138 = scmp.eq.s32.totalorder %s16, 1
      %p139 = scmp.ne.s32.totalorder %s134, %s136
      %p140 = scmp.eq.s32.totalorder %s16, 0
      %p141 = por %p139, %p140
      %p142 = scmp.ne.s32.totalorder %s134, %s136
      %p143 = scmp.eq.s32.totalorder %s21, 1
      %p144 = por %p142, %p143
      %p145 = scmp.ne.s32.totalorder %s136, %s137
      %p146 = scmp.eq.s32.totalorder %s21, 0
      %p147 = por %p145, %p146
      %p148 = scmp.ne.s32.totalorder %s136, %s137
      %p149 = scmp.eq.s32.totalorder %s22, 1
      %p150 = por %p148, %p149
      %p152 = scmp.ne.s32.totalorder %s137, %s151
      %p153 = scmp.eq.s32.totalorder %s22, 0
      %p154 = por %p152, %p153
      %s156 = sadd.s32 %s155, 1
      %p159 = scmp.eq.s32.totalorder %s16, 1
      %p160 = scmp.ne.s32.totalorder %s155, %s157
      %p161 = scmp.eq.s32.totalorder %s16, 0
      %p162 = por %p160, %p161
      %p163 = scmp.ne.s32.totalorder %s155, %s157
      %p164 = scmp.eq.s32.totalorder %s21, 1
      %p165 = por %p163, %p164
      %p166 = scmp.ne.s32.totalorder %s157, %s158
      %p167 = scmp.eq.s32.totalorder %s21, 0
      %p168 = por %p166, %p167
      %p169 = scmp.ne.s32.totalorder %s157, %s158
      %p170 = scmp.eq.s32.totalorder %s22, 1
      %p171 = por %p169, %p170
      %p173 = scmp.ne.s32.totalorder %s158, %s172
      %p174 = scmp.eq.s32.totalorder %s22, 0
      %p175 = por %p173, %p174
      %s176 = ssub.s32 %s16, %s23
      %p177 = scmp.eq.s32.totalorder %s176, 0
      %s179 = sadd.s32 %s178, 1
      %s180 = scalar_select %p177, %s178, %s179
      %p183 = pneg %p177
      %p184 = scmp.eq.s32.totalorder %s16, 1
      %p185 = por %p183, %p184
      %p186 = scmp.ne.s32.totalorder %s178, %s181
      %p187 = scmp.eq.s32.totalorder %s16, 0
      %p188 = por %p186, %p187
      %p189 = scmp.ne.s32.totalorder %s178, %s181
      %p190 = scmp.eq.s32.totalorder %s21, 1
      %p191 = por %p189, %p190
      %p192 = scmp.ne.s32.totalorder %s181, %s182
      %p193 = scmp.eq.s32.totalorder %s21, 0
      %p194 = por %p192, %p193
      %p195 = scmp.ne.s32.totalorder %s181, %s182
      %p196 = scmp.eq.s32.totalorder %s22, 1
      %p197 = por %p195, %p196
      %p199 = scmp.ne.s32.totalorder %s182, %s198
      %p200 = scmp.eq.s32.totalorder %s22, 0
      %p201 = por %p199, %p200
      %p202 = scmp.le.s32.totalorder 1, %s16
      %p203 = scmp.lt.s32.totalorder %s16, 3
      %p204 = pnand %p202, %p203
      %p205 = pneg %p204
      // Predicated region
      $region9: #{generator_forward.1} parent=5 // pred_check
        _
      $region10: #{generator_forward.1} parent=5 // pred_check_branch
        %207 = sbr.rel (%p204) target = $region12
      $region11: #{generator_forward.1} parent=5 // pred_region
        %s208 = ssub.s32 %s16, 1
        // Predicated region
        $region13: #{generator_forward.1} parent=11 // pred_check
          %p209 = pneg %p63
        $region14: #{generator_forward.1} parent=11 // pred_check_branch
          %211 = sbr.rel (%p209) target = $region16
        $region15: #{generator_forward.1} parent=11 // pred_region
          _
        $region16: #{generator_forward.1} parent=11 // pred_fallthru
          _
        // Predicated region
        $region17: #{generator_forward.1} parent=11 // pred_check
          %p212 = pneg %p84
        $region18: #{generator_forward.1} parent=11 // pred_check_branch
          %214 = sbr.rel (%p212) target = $region20
        $region19: #{generator_forward.1} parent=11 // pred_region
          _
        $region20: #{generator_forward.1} parent=11 // pred_fallthru
          _
        // Predicated region
        $region21: #{generator_forward.1} parent=11 // pred_check
          %p215 = pneg %p105
        $region22: #{generator_forward.1} parent=11 // pred_check_branch
          %217 = sbr.rel (%p215) target = $region24
        $region23: #{generator_forward.1} parent=11 // pred_region
          _
        $region24: #{generator_forward.1} parent=11 // pred_fallthru
          _
        // Predicated region
        $region25: #{generator_forward.1} parent=11 // pred_check
          %p218 = pneg %p126
        $region26: #{generator_forward.1} parent=11 // pred_check_branch
          %220 = sbr.rel (%p218) target = $region28
        $region27: #{generator_forward.1} parent=11 // pred_region
          _
        $region28: #{generator_forward.1} parent=11 // pred_fallthru
          _
        // Predicated region
        $region29: #{generator_forward.1} parent=11 // pred_check
          %p221 = pneg %p147
        $region30: #{generator_forward.1} parent=11 // pred_check_branch
          %223 = sbr.rel (%p221) target = $region32
        $region31: #{generator_forward.1} parent=11 // pred_region
          _
        $region32: #{generator_forward.1} parent=11 // pred_fallthru
          _
        // Predicated region
        $region33: #{generator_forward.1} parent=11 // pred_check
          %p224 = pneg %p168
        $region34: #{generator_forward.1} parent=11 // pred_check_branch
          %226 = sbr.rel (%p224) target = $region36
        $region35: #{generator_forward.1} parent=11 // pred_region
          _
        $region36: #{generator_forward.1} parent=11 // pred_fallthru
          _
      $region12: #{generator_forward.1} parent=5 // pred_fallthru
        _
      %p227 = scmp.lt.s32.totalorder %s16, 2
      // Predicated region
      $region37: #{generator_forward.1} parent=5 // pred_check
        %p228 = pneg %p227
      $region38: #{generator_forward.1} parent=5 // pred_check_branch
        %230 = sbr.rel (%p228) target = $region40
      $region39: #{generator_forward.1} parent=5 // pred_region
        // Predicated region
        $region41: #{generator_forward.1} parent=39 // pred_check
          %p231 = pneg %p36
        $region42: #{generator_forward.1} parent=39 // pred_check_branch
          %233 = sbr.rel (%p231) target = $region44
        $region43: #{generator_forward.1} parent=39 // pred_region
          %p234 = scmp.lt.s32.totalorder %s16, 1
          %s235 = scalar_select %p234, %s16, 1
          %s236 = smul.addr %s235, 8
          %s237 = scalar_lea.vmem %s0, %s236
        $region44: #{generator_forward.1} parent=39 // pred_fallthru
          _
      $region40: #{generator_forward.1} parent=5 // pred_fallthru
        _
      %p238 = scmp.le.s32.totalorder 1, %s16
      %p239 = scmp.lt.s32.totalorder %s16, 3
      %p240 = pnand %p238, %p239
      %p241 = pneg %p240
      // Predicated region
      $region45: #{generator_forward.1} parent=5 // pred_check
        _
      $region46: #{generator_forward.1} parent=5 // pred_check_branch
        %243 = sbr.rel (%p240) target = $region48
      $region47: #{generator_forward.1} parent=5 // pred_region
        %s244 = ssub.s32 %s16, 1
        %p245 = scmp.lt.s32.totalorder %s21, 1
        %s246 = scalar_select %p245, %s21, 1
        %s247 = smul.addr %s246, 8
        %s248 = scalar_lea.vmem %s0, %s247
        %p249 = pneg %p42
        %p250 = pneg %p39
        %p251 = pneg %p63
        %p252 = pneg %p60
        %p253 = pneg %p84
        %p254 = pneg %p81
        %p255 = pneg %p105
        %p256 = pneg %p102
        %p257 = pneg %p126
        %p258 = pneg %p123
        %p259 = pneg %p147
        %p260 = pneg %p144
        %p261 = pneg %p168
        %p262 = pneg %p165
        %p263 = pneg %p194
        %p264 = pneg %p191
        %s265 = sand.u32 %s181, 1
        %s266 = scalar_lea.sflag [#allocation3], %s265
        %s267 = sand.u32 %s181, 1
        %s268 = smul.addr %s267, 56
        %s269 = scalar_lea.vmem [#allocation2], %s268
        %p270 = scmp.lt.s32.totalorder %s21, 1
        %s271 = scalar_select %p270, %s21, 1
        %s272 = smul.addr %s271, 8
        %s273 = scalar_lea.vmem %s0, %s272
        %v274 = vld [vmem:[%s273] sm:$0xff]
        %v275 = vld [vmem:[%s1] sm:$0xff]
        %v276 = vld [vmem:[%s1 + $0x8] sm:$0xff]
        %v277 = vld [vmem:[%s1 + $0x10] sm:$0xff]
        %v278 = vld [vmem:[%s1 + $0x18] sm:$0xff]
        %v279 = vld [vmem:[%s2] sm:$0x1]
        %v281 = vlaneseq
        %v282 = vshrl.u32 %v281, 7
        %v283 = vsub.s32 0, %v282
        %v284 = vrot.slane %v279, %v283
        %vm286 = vcmask 261120
        %v288 = vsel %vm286, %v274, 0
        %290 = vmatprep.subr.mxu0 0.0
        %291 = vmatpush1.msra.mxu0 0.0
        %292 = vmatprep.subr.mxu0 0.0
        %293 = vmatpush1.msra.mxu0 0.0
        %294 = vmatprep.subr.mxu0 0.0
        %295 = vmatpush1.msra.mxu0 0.0
        %296 = vmatprep.subr.mxu0 0.0
        %297 = vmatpush1.msra.mxu0 0.0
        %298 = vmatprep.subr.mxu0 0.0
        %299 = vmatpush1.msra.mxu0 0.0
        %300 = vmatprep.subr.mxu0 0.0
        %301 = vmatpush1.msra.mxu0 0.0
        %302 = vmatprep.subr.mxu0 0.0
        %303 = vmatpush1.msra.mxu0 0.0
        %304 = vmatprep.subr.mxu0 0.0
        %305 = vmatpush1.msra.mxu0 0.0
        %306 = vmatprep.subr.mxu0 0.0
        %307 = vmatpush1.msra.mxu0 0.0
        %308 = vmatprep.subr.mxu0 0.0
        %309 = vmatpush1.msra.mxu0 0.0
        %310 = vmatprep.subr.mxu0 0.0
        %311 = vmatpush1.msra.mxu0 0.0
        %312 = vmatprep.subr.mxu0 0.0
        %313 = vmatpush1.msra.mxu0 0.0
        %314 = vmatprep.subr.mxu0 0.0
        %315 = vmatpush1.msra.mxu0 %v278
        %316 = vmatprep.subr.mxu0 0.0
        %317 = vmatpush1.msra.mxu0 %v277
        %318 = vmatprep.subr.mxu0 0.0
        %319 = vmatpush1.msra.mxu0 %v276
        %320 = vmatprep.subr.mxu0 0.0
        %321 = vmatpush1.msra.mxu0 %v275
        %322 = vmatprep.subr.mxu0 0.0
        %323 = vmatpush2.msra.mxu0 0.0
        %324 = vmatprep.subr.mxu0 0.0
        %325 = vmatpush2.msra.mxu0 0.0
        %326 = vmatprep.subr.mxu0 0.0
        %327 = vmatpush2.msra.mxu0 0.0
        %328 = vmatprep.subr.mxu0 0.0
        %329 = vmatpush2.msra.mxu0 0.0
        %330 = vmatprep.subr.mxu0 0.0
        %331 = vmatpush2.msra.mxu0 0.0
        %332 = vmatprep.subr.mxu0 0.0
        %333 = vmatpush2.msra.mxu0 0.0
        %334 = vmatprep.subr.mxu0 0.0
        %335 = vmatpush2.msra.mxu0 0.0
        %336 = vmatprep.subr.mxu0 0.0
        %337 = vmatpush2.msra.mxu0 0.0
        %338 = vmatprep.subr.mxu0 0.0
        %339 = vmatpush2.msra.mxu0 0.0
        %340 = vmatprep.subr.mxu0 0.0
        %341 = vmatpush2.msra.mxu0 0.0
        %342 = vmatprep.subr.mxu0 0.0
        %343 = vmatpush2.msra.mxu0 0.0
        %344 = vmatprep.subr.mxu0 0.0
        %345 = vmatpush2.msra.mxu0 0.0
        %346 = vmatprep.subr.mxu0 0.0
        %347 = vmatpush2.msra.mxu0 0.0
        %348 = vmatprep.subr.mxu0 0.0
        %349 = vmatpush2.msra.mxu0 0.0
        %350 = vmatprep.subr.mxu0 0.0
        %351 = vmatpush2.msra.mxu0 0.0
        %352 = vmatprep.subr.mxu0 0.0
        %353 = vmatpush2.msra.mxu0 0.0
        %354 = vmatprep.mubr.f32.mxu0 0.0
        %355 = vmatmul.mubr.f32.gmra.mxu0 %v288
        %v356 = vpop.f32.mrf.mxu0
        %v357 = vadd.f32 %v284, %v356
        %v358 = vpop.f32.mrf.mxu0
        %359 = vdwg.mxu0
        %v360 = vmax.f32 %v357, 0.0
        %v361 = vld [vmem:[%s3] sm:$0xff]
        %v362 = vld [vmem:[%s3 + $0x8] sm:$0xff]
        %v363 = vld [vmem:[%s3 + $0x10] sm:$0xff]
        %v364 = vld [vmem:[%s3 + $0x18] sm:$0xff]
        %v365 = vld [vmem:[%s3 + $0x20] sm:$0xff]
        %v366 = vld [vmem:[%s3 + $0x28] sm:$0xff]
        %v367 = vld [vmem:[%s3 + $0x30] sm:$0xff]
        %v368 = vld [vmem:[%s3 + $0x38] sm:$0xff]
        %v369 = vld [vmem:[%s3 + $0x40] sm:$0xff]
        %v370 = vld [vmem:[%s3 + $0x48] sm:$0xff]
        %v371 = vld [vmem:[%s3 + $0x50] sm:$0xff]
        %v372 = vld [vmem:[%s3 + $0x58] sm:$0xff]
        %v373 = vld [vmem:[%s3 + $0x60] sm:$0xff]
        %v374 = vld [vmem:[%s3 + $0x68] sm:$0xff]
        %v375 = vld [vmem:[%s3 + $0x70] sm:$0xff]
        %v376 = vld [vmem:[%s3 + $0x78] sm:$0xff]
        %v377 = vld [vmem:[%s4] sm:$0x1]
        %v379 = vlaneseq
        %v380 = vshrl.u32 %v379, 7
        %v381 = vsub.s32 0, %v380
        %v382 = vrot.slane %v377, %v381
        %384 = vmatprep.subr.mxu0 0.0
        %385 = vmatpush1.msra.mxu0 %v376
        %386 = vmatprep.subr.mxu0 0.0
        %387 = vmatpush1.msra.mxu0 %v375
        %388 = vmatprep.subr.mxu0 0.0
        %389 = vmatpush1.msra.mxu0 %v374
        %390 = vmatprep.subr.mxu0 0.0
        %391 = vmatpush1.msra.mxu0 %v373
        %392 = vmatprep.subr.mxu0 0.0
        %393 = vmatpush1.msra.mxu0 %v372
        %394 = vmatprep.subr.mxu0 0.0
        %395 = vmatpush1.msra.mxu0 %v371
        %396 = vmatprep.subr.mxu0 0.0
        %397 = vmatpush1.msra.mxu0 %v370
        %398 = vmatprep.subr.mxu0 0.0
        %399 = vmatpush1.msra.mxu0 %v369
        %400 = vmatprep.subr.mxu0 0.0
        %401 = vmatpush1.msra.mxu0 %v368
        %402 = vmatprep.subr.mxu0 0.0
        %403 = vmatpush1.msra.mxu0 %v367
        %404 = vmatprep.subr.mxu0 0.0
        %405 = vmatpush1.msra.mxu0 %v366
        %406 = vmatprep.subr.mxu0 0.0
        %407 = vmatpush1.msra.mxu0 %v365
        %408 = vmatprep.subr.mxu0 0.0
        %409 = vmatpush1.msra.mxu0 %v364
        %410 = vmatprep.subr.mxu0 0.0
        %411 = vmatpush1.msra.mxu0 %v363
        %412 = vmatprep.subr.mxu0 0.0
        %413 = vmatpush1.msra.mxu0 %v362
        %414 = vmatprep.subr.mxu0 0.0
        %415 = vmatpush1.msra.mxu0 %v361
        %416 = vmatprep.subr.mxu0 0.0
        %417 = vmatpush2.msra.mxu0 0.0
        %418 = vmatprep.subr.mxu0 0.0
        %419 = vmatpush2.msra.mxu0 0.0
        %420 = vmatprep.subr.mxu0 0.0
        %421 = vmatpush2.msra.mxu0 0.0
        %422 = vmatprep.subr.mxu0 0.0
        %423 = vmatpush2.msra.mxu0 0.0
        %424 = vmatprep.subr.mxu0 0.0
        %425 = vmatpush2.msra.mxu0 0.0
        %426 = vmatprep.subr.mxu0 0.0
        %427 = vmatpush2.msra.mxu0 0.0
        %428 = vmatprep.subr.mxu0 0.0
        %429 = vmatpush2.msra.mxu0 0.0
        %430 = vmatprep.subr.mxu0 0.0
        %431 = vmatpush2.msra.mxu0 0.0
        %432 = vmatprep.subr.mxu0 0.0
        %433 = vmatpush2.msra.mxu0 0.0
        %434 = vmatprep.subr.mxu0 0.0
        %435 = vmatpush2.msra.mxu0 0.0
        %436 = vmatprep.subr.mxu0 0.0
        %437 = vmatpush2.msra.mxu0 0.0
        %438 = vmatprep.subr.mxu0 0.0
        %439 = vmatpush2.msra.mxu0 0.0
        %440 = vmatprep.subr.mxu0 0.0
        %441 = vmatpush2.msra.mxu0 0.0
        %442 = vmatprep.subr.mxu0 0.0
        %443 = vmatpush2.msra.mxu0 0.0
        %444 = vmatprep.subr.mxu0 0.0
        %445 = vmatpush2.msra.mxu0 0.0
        %446 = vmatprep.subr.mxu0 0.0
        %447 = vmatpush2.msra.mxu0 0.0
        %448 = vmatprep.mubr.f32.mxu0 0.0
        %449 = vmatmul.mubr.f32.gmra.mxu0 %v360
        %v450 = vpop.f32.mrf.mxu0
        %v451 = vadd.f32 %v382, %v450
        %v452 = vpop.f32.mrf.mxu0
        %453 = vdwg.mxu0
        %v454 = vmax.f32 %v451, 0.0
        %v455 = vld [vmem:[%s5] sm:$0xff]
        %v456 = vld [vmem:[%s5 + $0x8] sm:$0xff]
        %v457 = vld [vmem:[%s5 + $0x10] sm:$0xff]
        %v458 = vld [vmem:[%s5 + $0x18] sm:$0xff]
        %v459 = vld [vmem:[%s5 + $0x20] sm:$0xff]
        %v460 = vld [vmem:[%s5 + $0x28] sm:$0xff]
        %v461 = vld [vmem:[%s5 + $0x30] sm:$0xff]
        %v462 = vld [vmem:[%s5 + $0x38] sm:$0xff]
        %v463 = vld [vmem:[%s5 + $0x40] sm:$0xff]
        %v464 = vld [vmem:[%s5 + $0x48] sm:$0xff]
        %v465 = vld [vmem:[%s5 + $0x50] sm:$0xff]
        %v466 = vld [vmem:[%s5 + $0x58] sm:$0xff]
        %v467 = vld [vmem:[%s5 + $0x60] sm:$0xff]
        %v468 = vld [vmem:[%s5 + $0x68] sm:$0xff]
        %v469 = vld [vmem:[%s5 + $0x70] sm:$0xff]
        %v470 = vld [vmem:[%s5 + $0x78] sm:$0xff]
        %v471 = vld [vmem:[%s5 + $0x80] sm:$0xff]
        %v472 = vld [vmem:[%s5 + $0x88] sm:$0xff]
        %v473 = vld [vmem:[%s5 + $0x90] sm:$0xff]
        %v474 = vld [vmem:[%s5 + $0x98] sm:$0xff]
        %v475 = vld [vmem:[%s5 + $0xa0] sm:$0xff]
        %v476 = vld [vmem:[%s5 + $0xa8] sm:$0xff]
        %v477 = vld [vmem:[%s5 + $0xb0] sm:$0xff]
        %v478 = vld [vmem:[%s5 + $0xb8] sm:$0xff]
        %v479 = vld [vmem:[%s5 + $0xc0] sm:$0xff]
        %v480 = vld [vmem:[%s5 + $0xc8] sm:$0xff]
        %v481 = vld [vmem:[%s5 + $0xd0] sm:$0xff]
        %v482 = vld [vmem:[%s5 + $0xd8] sm:$0xff]
        %v483 = vld [vmem:[%s5 + $0xe0] sm:$0xff]
        %v484 = vld [vmem:[%s5 + $0xe8] sm:$0xff]
        %v485 = vld [vmem:[%s5 + $0xf0] sm:$0xff]
        %v486 = vld [vmem:[%s5 + $0xf8] sm:$0xff]
        %v487 = vld [vmem:[%s5 + $0x100] sm:$0xff]
        %v488 = vld [vmem:[%s5 + $0x108] sm:$0xff]
        %v489 = vld [vmem:[%s5 + $0x110] sm:$0xff]
        %v490 = vld [vmem:[%s5 + $0x118] sm:$0xff]
        %v491 = vld [vmem:[%s5 + $0x120] sm:$0xff]
        %v492 = vld [vmem:[%s5 + $0x128] sm:$0xff]
        %v493 = vld [vmem:[%s5 + $0x130] sm:$0xff]
        %v494 = vld [vmem:[%s5 + $0x138] sm:$0xff]
        %v495 = vld [vmem:[%s5 + $0x140] sm:$0xff]
        %v496 = vld [vmem:[%s5 + $0x148] sm:$0xff]
        %v497 = vld [vmem:[%s5 + $0x150] sm:$0xff]
        %v498 = vld [vmem:[%s5 + $0x158] sm:$0xff]
        %v499 = vld [vmem:[%s5 + $0x160] sm:$0xff]
        %v500 = vld [vmem:[%s5 + $0x168] sm:$0xff]
        %v501 = vld [vmem:[%s5 + $0x170] sm:$0xff]
        %v502 = vld [vmem:[%s5 + $0x178] sm:$0xff]
        %v503 = vld [vmem:[%s5 + $0x180] sm:$0xff]
        %v504 = vld [vmem:[%s5 + $0x188] sm:$0xff]
        %v505 = vld [vmem:[%s5 + $0x190] sm:$0xff]
        %v506 = vld [vmem:[%s5 + $0x198] sm:$0xff]
        %v507 = vld [vmem:[%s5 + $0x1a0] sm:$0xff]
        %v508 = vld [vmem:[%s5 + $0x1a8] sm:$0xff]
        %v509 = vld [vmem:[%s5 + $0x1b0] sm:$0xff]
        %v510 = vld [vmem:[%s5 + $0x1b8] sm:$0xff]
        %v511 = vld [vmem:[%s6] sm:$0xff]
        %v513 = vlaneseq
        %v514 = vshrl.u32 %v513, 7
        %v515 = vsub.s32 0, %v514
        %v516 = vrot.slane %v511, %v515
        %v517 = vlaneseq
        %v518 = vshrl.u32 %v517, 7
        %v519 = vsub.s32 1, %v518
        %v520 = vrot.slane %v511, %v519
        %v521 = vlaneseq
        %v522 = vshrl.u32 %v521, 7
        %v523 = vsub.s32 2, %v522
        %v524 = vrot.slane %v511, %v523
        %v525 = vlaneseq
        %v526 = vshrl.u32 %v525, 7
        %v527 = vsub.s32 3, %v526
        %v528 = vrot.slane %v511, %v527
        %v529 = vlaneseq
        %v530 = vshrl.u32 %v529, 7
        %v531 = vsub.s32 4, %v530
        %v532 = vrot.slane %v511, %v531
        %v533 = vlaneseq
        %v534 = vshrl.u32 %v533, 7
        %v535 = vsub.s32 5, %v534
        %v536 = vrot.slane %v511, %v535
        %v537 = vlaneseq
        %v538 = vshrl.u32 %v537, 7
        %v539 = vsub.s32 6, %v538
        %v540 = vrot.slane %v511, %v539
        %vm548 = vcmask 523264
        %v550 = vsel %vm548, %v454, 0
        %552 = vmatprep.subr.mxu0 0.0
        %553 = vmatpush1.msra.mxu0 0.0
        %554 = vmatprep.subr.mxu0 0.0
        %555 = vmatpush1.msra.mxu0 0.0
        %556 = vmatprep.subr.mxu0 0.0
        %557 = vmatpush1.msra.mxu0 0.0
        %558 = vmatprep.subr.mxu0 0.0
        %559 = vmatpush1.msra.mxu0 0.0
        %560 = vmatprep.subr.mxu0 0.0
        %561 = vmatpush1.msra.mxu0 0.0
        %562 = vmatprep.subr.mxu0 0.0
        %563 = vmatpush1.msra.mxu0 0.0
        %564 = vmatprep.subr.mxu0 0.0
        %565 = vmatpush1.msra.mxu0 0.0
        %566 = vmatprep.subr.mxu0 0.0
        %567 = vmatpush1.msra.mxu0 0.0
        %568 = vmatprep.subr.mxu0 %v505
        %569 = vmatpush1.msra.mxu0 %v504
        %570 = vmatprep.subr.mxu0 %v498
        %571 = vmatpush1.msra.mxu0 %v497
        %572 = vmatprep.subr.mxu0 %v491
        %573 = vmatpush1.msra.mxu0 %v490
        %574 = vmatprep.subr.mxu0 %v484
        %575 = vmatpush1.msra.mxu0 %v483
        %576 = vmatprep.subr.mxu0 %v477
        %577 = vmatpush1.msra.mxu0 %v476
        %578 = vmatprep.subr.mxu0 %v470
        %579 = vmatpush1.msra.mxu0 %v469
        %580 = vmatprep.subr.mxu0 %v463
        %581 = vmatpush1.msra.mxu0 %v462
        %582 = vmatprep.subr.mxu0 %v456
        %583 = vmatpush1.msra.mxu0 %v455
        %584 = vmatprep.subr.mxu0 0.0
        %585 = vmatpush2.msra.mxu0 0.0
        %586 = vmatprep.subr.mxu0 0.0
        %587 = vmatpush2.msra.mxu0 0.0
        %588 = vmatprep.subr.mxu0 0.0
        %589 = vmatpush2.msra.mxu0 0.0
        %590 = vmatprep.subr.mxu0 0.0
        %591 = vmatpush2.msra.mxu0 0.0
        %592 = vmatprep.subr.mxu0 0.0
        %593 = vmatpush2.msra.mxu0 0.0
        %594 = vmatprep.subr.mxu0 0.0
        %595 = vmatpush2.msra.mxu0 0.0
        %596 = vmatprep.subr.mxu0 0.0
        %597 = vmatpush2.msra.mxu0 0.0
        %598 = vmatprep.subr.mxu0 0.0
        %599 = vmatpush2.msra.mxu0 0.0
        %600 = vmatprep.subr.mxu0 0.0
        %601 = vmatpush2.msra.mxu0 0.0
        %602 = vmatprep.subr.mxu0 0.0
        %603 = vmatpush2.msra.mxu0 0.0
        %604 = vmatprep.subr.mxu0 0.0
        %605 = vmatpush2.msra.mxu0 0.0
        %606 = vmatprep.subr.mxu0 0.0
        %607 = vmatpush2.msra.mxu0 0.0
        %608 = vmatprep.subr.mxu0 0.0
        %609 = vmatpush2.msra.mxu0 0.0
        %610 = vmatprep.subr.mxu0 0.0
        %611 = vmatpush2.msra.mxu0 0.0
        %612 = vmatprep.subr.mxu0 0.0
        %613 = vmatpush2.msra.mxu0 0.0
        %614 = vmatprep.subr.mxu0 0.0
        %615 = vmatpush2.msra.mxu0 0.0
        %616 = vmatprep.mubr.f32.mxu0 0.0
        %617 = vmatmul.mubr.f32.gmra.mxu0 %v550
        %v618 = vpop.f32.mrf.mxu0
        %v619 = vadd.f32 %v516, %v618
        %v620 = vpop.f32.mrf.mxu0
        %v621 = vadd.f32 %v520, %v620
        %622 = vdwg.mxu0
        %623 = vmatprep.subr.mxu0 0.0
        %624 = vmatpush1.msra.mxu0 0.0
        %625 = vmatprep.subr.mxu0 0.0
        %626 = vmatpush1.msra.mxu0 0.0
        %627 = vmatprep.subr.mxu0 0.0
        %628 = vmatpush1.msra.mxu0 0.0
        %629 = vmatprep.subr.mxu0 0.0
        %630 = vmatpush1.msra.mxu0 0.0
        %631 = vmatprep.subr.mxu0 0.0
        %632 = vmatpush1.msra.mxu0 0.0
        %633 = vmatprep.subr.mxu0 0.0
        %634 = vmatpush1.msra.mxu0 0.0
        %635 = vmatprep.subr.mxu0 0.0
        %636 = vmatpush1.msra.mxu0 0.0
        %637 = vmatprep.subr.mxu0 0.0
        %638 = vmatpush1.msra.mxu0 0.0
        %639 = vmatprep.subr.mxu0 %v507
        %640 = vmatpush1.msra.mxu0 %v506
        %641 = vmatprep.subr.mxu0 %v500
        %642 = vmatpush1.msra.mxu0 %v499
        %643 = vmatprep.subr.mxu0 %v493
        %644 = vmatpush1.msra.mxu0 %v492
        %645 = vmatprep.subr.mxu0 %v486
        %646 = vmatpush1.msra.mxu0 %v485
        %647 = vmatprep.subr.mxu0 %v479
        %648 = vmatpush1.msra.mxu0 %v478
        %649 = vmatprep.subr.mxu0 %v472
        %650 = vmatpush1.msra.mxu0 %v471
        %651 = vmatprep.subr.mxu0 %v465
        %652 = vmatpush1.msra.mxu0 %v464
        %653 = vmatprep.subr.mxu0 %v458
        %654 = vmatpush1.msra.mxu0 %v457
        %655 = vmatprep.subr.mxu0 0.0
        %656 = vmatpush2.msra.mxu0 0.0
        %657 = vmatprep.subr.mxu0 0.0
        %658 = vmatpush2.msra.mxu0 0.0
        %659 = vmatprep.subr.mxu0 0.0
        %660 = vmatpush2.msra.mxu0 0.0
        %661 = vmatprep.subr.mxu0 0.0
        %662 = vmatpush2.msra.mxu0 0.0
        %663 = vmatprep.subr.mxu0 0.0
        %664 = vmatpush2.msra.mxu0 0.0
        %665 = vmatprep.subr.mxu0 0.0
        %666 = vmatpush2.msra.mxu0 0.0
        %667 = vmatprep.subr.mxu0 0.0
        %668 = vmatpush2.msra.mxu0 0.0
        %669 = vmatprep.subr.mxu0 0.0
        %670 = vmatpush2.msra.mxu0 0.0
        %671 = vmatprep.subr.mxu0 0.0
        %672 = vmatpush2.msra.mxu0 0.0
        %673 = vmatprep.subr.mxu0 0.0
        %674 = vmatpush2.msra.mxu0 0.0
        %675 = vmatprep.subr.mxu0 0.0
        %676 = vmatpush2.msra.mxu0 0.0
        %677 = vmatprep.subr.mxu0 0.0
        %678 = vmatpush2.msra.mxu0 0.0
        %679 = vmatprep.subr.mxu0 0.0
        %680 = vmatpush2.msra.mxu0 0.0
        %681 = vmatprep.subr.mxu0 0.0
        %682 = vmatpush2.msra.mxu0 0.0
        %683 = vmatprep.subr.mxu0 0.0
        %684 = vmatpush2.msra.mxu0 0.0
        %685 = vmatprep.subr.mxu0 0.0
        %686 = vmatpush2.msra.mxu0 0.0
        %687 = vmatprep.mubr.f32.mxu0 0.0
        %688 = vmatmul.mubr.f32.gmra.mxu0 %v550
        %v689 = vpop.f32.mrf.mxu0
        %v690 = vadd.f32 %v524, %v689
        %v691 = vpop.f32.mrf.mxu0
        %v692 = vadd.f32 %v528, %v691
        %693 = vdwg.mxu0
        %694 = vmatprep.subr.mxu0 0.0
        %695 = vmatpush1.msra.mxu0 0.0
        %696 = vmatprep.subr.mxu0 0.0
        %697 = vmatpush1.msra.mxu0 0.0
        %698 = vmatprep.subr.mxu0 0.0
        %699 = vmatpush1.msra.mxu0 0.0
        %700 = vmatprep.subr.mxu0 0.0
        %701 = vmatpush1.msra.mxu0 0.0
        %702 = vmatprep.subr.mxu0 0.0
        %703 = vmatpush1.msra.mxu0 0.0
        %704 = vmatprep.subr.mxu0 0.0
        %705 = vmatpush1.msra.mxu0 0.0
        %706 = vmatprep.subr.mxu0 0.0
        %707 = vmatpush1.msra.mxu0 0.0
        %708 = vmatprep.subr.mxu0 0.0
        %709 = vmatpush1.msra.mxu0 0.0
        %710 = vmatprep.subr.mxu0 %v509
        %711 = vmatpush1.msra.mxu0 %v508
        %712 = vmatprep.subr.mxu0 %v502
        %713 = vmatpush1.msra.mxu0 %v501
        %714 = vmatprep.subr.mxu0 %v495
        %715 = vmatpush1.msra.mxu0 %v494
        %716 = vmatprep.subr.mxu0 %v488
        %717 = vmatpush1.msra.mxu0 %v487
        %718 = vmatprep.subr.mxu0 %v481
        %719 = vmatpush1.msra.mxu0 %v480
        %720 = vmatprep.subr.mxu0 %v474
        %721 = vmatpush1.msra.mxu0 %v473
        %722 = vmatprep.subr.mxu0 %v467
        %723 = vmatpush1.msra.mxu0 %v466
        %724 = vmatprep.subr.mxu0 %v460
        %725 = vmatpush1.msra.mxu0 %v459
        %726 = vmatprep.subr.mxu0 0.0
        %727 = vmatpush2.msra.mxu0 0.0
        %728 = vmatprep.subr.mxu0 0.0
        %729 = vmatpush2.msra.mxu0 0.0
        %730 = vmatprep.subr.mxu0 0.0
        %731 = vmatpush2.msra.mxu0 0.0
        %732 = vmatprep.subr.mxu0 0.0
        %733 = vmatpush2.msra.mxu0 0.0
        %734 = vmatprep.subr.mxu0 0.0
        %735 = vmatpush2.msra.mxu0 0.0
        %736 = vmatprep.subr.mxu0 0.0
        %737 = vmatpush2.msra.mxu0 0.0
        %738 = vmatprep.subr.mxu0 0.0
        %739 = vmatpush2.msra.mxu0 0.0
        %740 = vmatprep.subr.mxu0 0.0
        %741 = vmatpush2.msra.mxu0 0.0
        %742 = vmatprep.subr.mxu0 0.0
        %743 = vmatpush2.msra.mxu0 0.0
        %744 = vmatprep.subr.mxu0 0.0
        %745 = vmatpush2.msra.mxu0 0.0
        %746 = vmatprep.subr.mxu0 0.0
        %747 = vmatpush2.msra.mxu0 0.0
        %748 = vmatprep.subr.mxu0 0.0
        %749 = vmatpush2.msra.mxu0 0.0
        %750 = vmatprep.subr.mxu0 0.0
        %751 = vmatpush2.msra.mxu0 0.0
        %752 = vmatprep.subr.mxu0 0.0
        %753 = vmatpush2.msra.mxu0 0.0
        %754 = vmatprep.subr.mxu0 0.0
        %755 = vmatpush2.msra.mxu0 0.0
        %756 = vmatprep.subr.mxu0 0.0
        %757 = vmatpush2.msra.mxu0 0.0
        %758 = vmatprep.mubr.f32.mxu0 0.0
        %759 = vmatmul.mubr.f32.gmra.mxu0 %v550
        %v760 = vpop.f32.mrf.mxu0
        %v761 = vadd.f32 %v532, %v760
        %v762 = vpop.f32.mrf.mxu0
        %v763 = vadd.f32 %v536, %v762
        %764 = vdwg.mxu0
        %765 = vmatprep.subr.mxu0 0.0
        %766 = vmatpush1.msra.mxu0 0.0
        %767 = vmatprep.subr.mxu0 0.0
        %768 = vmatpush1.msra.mxu0 0.0
        %769 = vmatprep.subr.mxu0 0.0
        %770 = vmatpush1.msra.mxu0 0.0
        %771 = vmatprep.subr.mxu0 0.0
        %772 = vmatpush1.msra.mxu0 0.0
        %773 = vmatprep.subr.mxu0 0.0
        %774 = vmatpush1.msra.mxu0 0.0
        %775 = vmatprep.subr.mxu0 0.0
        %776 = vmatpush1.msra.mxu0 0.0
        %777 = vmatprep.subr.mxu0 0.0
        %778 = vmatpush1.msra.mxu0 0.0
        %779 = vmatprep.subr.mxu0 0.0
        %780 = vmatpush1.msra.mxu0 0.0
        %781 = vmatprep.subr.mxu0 0.0
        %782 = vmatpush1.msra.mxu0 %v510
        %783 = vmatprep.subr.mxu0 0.0
        %784 = vmatpush1.msra.mxu0 %v503
        %785 = vmatprep.subr.mxu0 0.0
        %786 = vmatpush1.msra.mxu0 %v496
        %787 = vmatprep.subr.mxu0 0.0
        %788 = vmatpush1.msra.mxu0 %v489
        %789 = vmatprep.subr.mxu0 0.0
        %790 = vmatpush1.msra.mxu0 %v482
        %791 = vmatprep.subr.mxu0 0.0
        %792 = vmatpush1.msra.mxu0 %v475
        %793 = vmatprep.subr.mxu0 0.0
        %794 = vmatpush1.msra.mxu0 %v468
        %795 = vmatprep.subr.mxu0 0.0
        %796 = vmatpush1.msra.mxu0 %v461
        %797 = vmatprep.subr.mxu0 0.0
        %798 = vmatpush2.msra.mxu0 0.0
        %799 = vmatprep.subr.mxu0 0.0
        %800 = vmatpush2.msra.mxu0 0.0
        %801 = vmatprep.subr.mxu0 0.0
        %802 = vmatpush2.msra.mxu0 0.0
        %803 = vmatprep.subr.mxu0 0.0
        %804 = vmatpush2.msra.mxu0 0.0
        %805 = vmatprep.subr.mxu0 0.0
        %806 = vmatpush2.msra.mxu0 0.0
        %807 = vmatprep.subr.mxu0 0.0
        %808 = vmatpush2.msra.mxu0 0.0
        %809 = vmatprep.subr.mxu0 0.0
        %810 = vmatpush2.msra.mxu0 0.0
        %811 = vmatprep.subr.mxu0 0.0
        %812 = vmatpush2.msra.mxu0 0.0
        %813 = vmatprep.subr.mxu0 0.0
        %814 = vmatpush2.msra.mxu0 0.0
        %815 = vmatprep.subr.mxu0 0.0
        %816 = vmatpush2.msra.mxu0 0.0
        %817 = vmatprep.subr.mxu0 0.0
        %818 = vmatpush2.msra.mxu0 0.0
        %819 = vmatprep.subr.mxu0 0.0
        %820 = vmatpush2.msra.mxu0 0.0
        %821 = vmatprep.subr.mxu0 0.0
        %822 = vmatpush2.msra.mxu0 0.0
        %823 = vmatprep.subr.mxu0 0.0
        %824 = vmatpush2.msra.mxu0 0.0
        %825 = vmatprep.subr.mxu0 0.0
        %826 = vmatpush2.msra.mxu0 0.0
        %827 = vmatprep.subr.mxu0 0.0
        %828 = vmatpush2.msra.mxu0 0.0
        %829 = vmatprep.mubr.f32.mxu0 0.0
        %830 = vmatmul.mubr.f32.gmra.mxu0 %v550
        %v831 = vpop.f32.mrf.mxu0
        %v832 = vadd.f32 %v540, %v831
        %v833 = vpop.f32.mrf.mxu0
        %834 = vdwg.mxu0
        %v835 = vtanh.pop %v619
        %v836 = vtanh.pop %v621
        %v837 = vtanh.pop %v690
        %v838 = vtanh.pop %v692
        %v839 = vtanh.pop %v761
        %v840 = vtanh.pop %v763
        %v841 = vtanh.pop %v832
        %842 = vst [vmem:[%s269] sm:$0xff] %v835
        %843 = vst [vmem:[%s269 + $0x8] sm:$0xff] %v836
        %844 = vst [vmem:[%s269 + $0x10] sm:$0xff] %v837
        %845 = vst [vmem:[%s269 + $0x18] sm:$0xff] %v838
        %846 = vst [vmem:[%s269 + $0x20] sm:$0xff] %v839
        %847 = vst [vmem:[%s269 + $0x28] sm:$0xff] %v840
        %848 = vst [vmem:[%s269 + $0x30] sm:$0xff] %v841
        %s849 = sand.u32 %s181, 1
        %s850 = scalar_lea.sflag [#allocation3], %s849
        %s851 = sand.u32 %s181, 1
        %s852 = smul.addr %s851, 56
        %s853 = scalar_lea.vmem [#allocation2], %s852
        // Predicated region
        $region49: #{generator_forward.1} parent=47 // pred_check
          %p854 = pneg %p191
        $region50: #{generator_forward.1} parent=47 // pred_check_branch
          %856 = sbr.rel (%p854) target = $region52
        $region51: #{generator_forward.1} parent=47 // pred_region
          %s858 = ssub.s32 896, 896
          %859 = vsyncadd %s850, %s858
          %s860 = smul.addr %s21, 7
          %s861 = smul.addr %s860, 128
          %s862 = scalar_lea.hbm %s7, %s861
          %s864 = sshll.u32 %s853, 4
          %s865 = int_to_ptr.vmem [resolvable:$true] %s864
          %867 = dma.vmem_to_hbm [thread:$0]  %s865, 896, %s862, %s850
        $region52: #{generator_forward.1} parent=47 // pred_fallthru
          _
      $region48: #{generator_forward.1} parent=5 // pred_fallthru
        _
      %p868 = scmp.le.s32.totalorder 2, %s16
      // Predicated region
      $region53: #{generator_forward.1} parent=5 // pred_check
        %p869 = pneg %p868
      $region54: #{generator_forward.1} parent=5 // pred_check_branch
        %871 = sbr.rel (%p869) target = $region56
      $region55: #{generator_forward.1} parent=5 // pred_region
        %s872 = ssub.s32 %s16, 2
        // Predicated region
        $region57: #{generator_forward.1} parent=55 // pred_check
          %p873 = pneg %p197
        $region58: #{generator_forward.1} parent=55 // pred_check_branch
          %875 = sbr.rel (%p873) target = $region60
        $region59: #{generator_forward.1} parent=55 // pred_region
          %s876 = sand.u32 %s182, 1
          %s877 = scalar_lea.sflag [#allocation3], %s876
          %s878 = sand.u32 %s182, 1
          %s879 = smul.addr %s878, 56
          %s880 = scalar_lea.vmem [#allocation2], %s879
          %881 = dma.done %s877, 896
        $region60: #{generator_forward.1} parent=55 // pred_fallthru
          _
      $region56: #{generator_forward.1} parent=5 // pred_fallthru
        _
    $region6: #{generator_forward.1} parent=1 // loop_footer
      %s20 = sadd.s32 1, %s16
    $region7: #{generator_forward.1} parent=1 // loop_footer_branch
      %15 = sbr.rel target = $region3
    $region8: #{generator_forward.1} parent=1 // loop_exit
      _
    %882 = vsyncpa [#allocation3], 1
    %s883 = scalar_lea.sflag [#allocation3], 1
    %884 = vsyncpa %s883, 1

</llo_original>
